<compile_context>
chip_gen: v7x
topology: tpu7x:2x2x1
jax: 0.10.0
libtpu: 0.0.40
codegen_flags: <defaults>
</compile_context>

<pallas_src>
import jax
import jax.numpy as jnp
from jax.experimental import pallas as pl
from jax.experimental.pallas import tpu as pltpu


# ---------------------------------------------------------------------------
# Fused kernel: structure probs + Bernoulli KL + synthetic SCM matmul + MSE
# ---------------------------------------------------------------------------
def _fused_kernel(gamma_ref, mask_ref, logq_ref, log1mq_ref, w_ref, x_ref,
                  probs_ref, xhat_ref, scal_ref):
    gamma = gamma_ref[...]                        # [N, N] f32 structural logits
    mask = mask_ref[...] > 0.5                    # [N, N] bool edge mask
    log_q = logq_ref[...]                         # [N, N] precomputed log(prior)
    log1m_q = log1mq_ref[...]                     # [N, N] precomputed log1p(-prior)

    # --- structure: probs = clamp_probs(sigmoid(masked gamma)) -------------
    # Mask AFTER the sigmoid: sigmoid(-inf) == 0 -> clamp to eps gives the
    # identical result without pushing inf through the EUP exp path.
    eps = jnp.float32(jnp.finfo(jnp.float32).eps)
    p_sig = jax.nn.sigmoid(gamma)
    p = jnp.where(mask, p_sig, jnp.float32(0.0))
    p = jnp.clip(p, eps, 1.0 - eps)
    probs_ref[...] = p

    # --- structure: KL(Bern(p) || Bern(q)), zeroed off-mask, summed --------
    # log(sigmoid(g)) = -softplus(-g),  log1p(-sigmoid(g)) = -softplus(g)
    def _softplus(v):
        return jnp.maximum(v, 0.0) + jnp.log1p(jnp.exp(-jnp.abs(v)))

    log_p = -_softplus(-gamma)
    log_1mp = -_softplus(gamma)
    kl = p * (log_p - log_q) + (1.0 - p) * (log_1mp - log1m_q)
    kl = jnp.where(mask, kl, jnp.float32(0.0))
    kl_sum = jnp.sum(kl)

    # --- synthetic SCM: one lane-dense MXU matmul ---------------------------
    #   x_hat2d[j, m] = sum_i (p*W)[i, j] * x2d[i, m]      (== a.T @ x2d)
    a = p * w_ref[...]                            # [N, N] adjacency-weighted mechanism
    x2d = x_ref[...]                              # [N, B*D]  (lane-dense)
    x_hat = jax.lax.dot_general(
        a, x2d, (((0,), (0,)), ((), ())),
        preferred_element_type=jnp.float32)       # [N, B*D]
    xhat_ref[...] = x_hat

    diff = x_hat - x2d
    denom = jnp.float32(x2d.shape[0] * x2d.shape[1])
    loss = jnp.sum(diff * diff) / denom

    # merged scalar outputs: [kl_sum, scm_loss]
    scal_ref[0, 0] = kl_sum
    scal_ref[0, 1] = loss


def fused_call(gamma, edge_mask_f, log_q, log1m_q, w_scm, x2d):
    n = gamma.shape[0]
    cols = x2d.shape[1]

    cost = pl.CostEstimate(
        flops=int(2 * n * n * cols + 16 * n * n),
        transcendentals=int(3 * n * n),
        bytes_accessed=int(4 * (6 * n * n + 2 * n * cols + 2)),
    )

    probs, xhat2d, scalars = pl.pallas_call(
        _fused_kernel,
        out_shape=(
            jax.ShapeDtypeStruct((n, n), jnp.float32),      # probs (structure_pred)
            jax.ShapeDtypeStruct((n, cols), jnp.float32),   # x_hat, [N, B*D]
            jax.ShapeDtypeStruct((1, 2), jnp.float32),      # [kl, scm_loss]
        ),
        in_specs=[
            pl.BlockSpec((n, n), lambda: (0, 0)),           # gamma
            pl.BlockSpec((n, n), lambda: (0, 0)),           # edge mask
            pl.BlockSpec((n, n), lambda: (0, 0)),           # log(prior)
            pl.BlockSpec((n, n), lambda: (0, 0)),           # log1p(-prior)
            pl.BlockSpec((n, n), lambda: (0, 0)),           # synthetic SCM weights
            pl.BlockSpec((n, cols), lambda: (0, 0)),        # x2d
        ],
        out_specs=(
            pl.BlockSpec((n, n), lambda: (0, 0)),
            pl.BlockSpec((n, cols), lambda: (0, 0)),
            pl.BlockSpec(memory_space=pltpu.MemorySpace.SMEM),
        ),
        compiler_params=pltpu.CompilerParams(vmem_limit_bytes=16 * 1024 * 1024),
        cost_estimate=cost,
    )(gamma, edge_mask_f, log_q, log1m_q, w_scm, x2d)
    return probs, xhat2d, scalars


# ---------------------------------------------------------------------------
# Forward pass glue (mirrors CausalStructure.forward, estimator='r')
# ---------------------------------------------------------------------------
@jax.jit
def causal_structure_forward(x, gamma, w_scm, edge_mask_f, graph_prior, temperature):
    b, n, d = x.shape

    # permute(x, temperature) -> (x, None, zeros(1))   (identity)
    x_ordered = x
    kl_perm = jnp.zeros((1,), jnp.float32)

    # Wrapper-side layout + constant prep so the kernel stays lean:
    #   x2d[i, b*D + d] = x[b, i, d]   (lane-dense MXU operand, width B*D)
    x2d = jnp.transpose(x_ordered, (1, 0, 2)).reshape(n, b * d)
    eps = jnp.finfo(jnp.float32).eps
    q = jnp.clip(graph_prior, eps, 1.0 - eps)
    log_q = jnp.log(q)
    log1m_q = jnp.log1p(-q)

    # get_graph + scm, fused into one Pallas call (estimator='r': r_samples = probs)
    probs, xhat2d, scalars = fused_call(gamma, edge_mask_f, log_q, log1m_q, w_scm, x2d)
    bit_vector_z = probs
    encoder_entropy = scalars[0, 0]      # Bernoulli KL sum (name follows the reference)
    scm_loss = scalars[0, 1]

    x_hat = jnp.transpose(xhat2d.reshape(n, b, d), (1, 0, 2))   # back to [B, N, D]

    # regularizer(z, mixer) -> (0.0, 0.0, zeros(1))
    graph_reg1 = jnp.float32(0.0)
    graph_reg2 = jnp.float32(0.0)
    delta = jnp.zeros((1,), jnp.float32)

    full_loss = scm_loss + encoder_entropy + jnp.mean(kl_perm) + graph_reg1 + graph_reg2

    model_outputs = {
        "x_hat": x_hat,
        "loss": full_loss,
        "encoder_entropy": encoder_entropy,
        "structure_pred": bit_vector_z,
        "probs01": probs[0, 1],
        "probs10": probs[1, 0],
        "delta_constraint": delta[0],
    }
    info = {}
    return full_loss, model_outputs, info


if __name__ == "__main__":
    key = jax.random.PRNGKey(0)
    k_gamma, k_w, k_x = jax.random.split(key, 3)

    N = 8          # number of causal variables (scm.n)
    D = 128        # features per variable
    B = 4          # batch size

    # Parameters (deterministic synthetic init, matching __init__ shapes)
    gamma = jax.random.normal(k_gamma, (N, N), dtype=jnp.float32)          # nn.Parameter(randn(n, n))
    graph_prior = jnp.ones((N, N), dtype=jnp.float32) * 0.5                # registered buffer
    edge_mask_f = (1.0 - jnp.eye(N, dtype=jnp.float32))                    # edge_mask: no self-loops
    w_scm = jax.random.normal(k_w, (N, N), dtype=jnp.float32) * 0.1        # synthetic SCM weights

    # Input
    x = jax.random.normal(k_x, (B, N, D), dtype=jnp.float32)
    temperature = jnp.float32(1.0)

    full_loss, model_outputs, info = causal_structure_forward(
        x, gamma, w_scm, edge_mask_f, graph_prior, temperature
    )
    jax.block_until_ready(full_loss)
    jax.block_until_ready(model_outputs["structure_pred"])
    jax.block_until_ready(model_outputs["x_hat"])

    print("KERNEL_OK")
</pallas_src>

<mosaic_0001>
module attributes {stable_mosaic.version = 11 : i64} {
  func.func @_fused_kernel(%arg0: memref<8x8xf32, #tpu.memory_space<vmem>>, %arg1: memref<8x8xf32, #tpu.memory_space<vmem>>, %arg2: memref<8x8xf32, #tpu.memory_space<vmem>>, %arg3: memref<8x8xf32, #tpu.memory_space<vmem>>, %arg4: memref<8x8xf32, #tpu.memory_space<vmem>>, %arg5: memref<8x512xf32, #tpu.memory_space<vmem>>, %arg6: memref<8x8xf32, #tpu.memory_space<vmem>>, %arg7: memref<8x512xf32, #tpu.memory_space<vmem>>, %arg8: memref<1x2xf32, #tpu.memory_space<smem>>) attributes {dimension_semantics = [], scalar_prefetch = 0 : i64, scratch_operands = 0 : i64, tpu.core_type = #tpu.core_type<tc>} {
    %c0 = arith.constant 0 : index
    %c0_0 = arith.constant 0 : index
    %0 = vector.load %arg0[%c0, %c0_0] : memref<8x8xf32, #tpu.memory_space<vmem>>, vector<8x8xf32>
    %c0_1 = arith.constant 0 : index
    %c0_2 = arith.constant 0 : index
    %1 = vector.load %arg1[%c0_1, %c0_2] : memref<8x8xf32, #tpu.memory_space<vmem>>, vector<8x8xf32>
    %cst = arith.constant 5.000000e-01 : f32
    %2 = vector.broadcast %cst : f32 to vector<8x8xf32>
    %3 = arith.cmpf ogt, %1, %2 : vector<8x8xf32>
    %c0_3 = arith.constant 0 : index
    %c0_4 = arith.constant 0 : index
    %4 = vector.load %arg2[%c0_3, %c0_4] : memref<8x8xf32, #tpu.memory_space<vmem>>, vector<8x8xf32>
    %c0_5 = arith.constant 0 : index
    %c0_6 = arith.constant 0 : index
    %5 = vector.load %arg3[%c0_5, %c0_6] : memref<8x8xf32, #tpu.memory_space<vmem>>, vector<8x8xf32>
    %6 = arith.negf %0 : vector<8x8xf32>
    %7 = math.exp %6 : vector<8x8xf32>
    %cst_7 = arith.constant 1.000000e+00 : f32
    %8 = vector.broadcast %cst_7 : f32 to vector<8x8xf32>
    %9 = arith.addf %8, %7 : vector<8x8xf32>
    %10 = arith.divf %8, %9 : vector<8x8xf32>
    %cst_8 = arith.constant 0.000000e+00 : f32
    %11 = vector.broadcast %cst_8 : f32 to vector<8x8xf32>
    %12 = arith.select %3, %10, %11 : vector<8x8xi1>, vector<8x8xf32>
    %cst_9 = arith.constant 1.000000e+00 : f32
    %cst_10 = arith.constant 1.1920929E-7 : f32
    %13 = arith.subf %cst_9, %cst_10 : f32
    %cst_11 = arith.constant 1.1920929E-7 : f32
    %14 = vector.broadcast %cst_11 : f32 to vector<8x8xf32>
    %15 = arith.maximumf %14, %12 : vector<8x8xf32>
    %16 = vector.broadcast %13 : f32 to vector<8x8xf32>
    %17 = arith.minimumf %16, %15 : vector<8x8xf32>
    %c0_12 = arith.constant 0 : index
    %c0_13 = arith.constant 0 : index
    %18 = vector.load %arg6[%c0_12, %c0_13] : memref<8x8xf32, #tpu.memory_space<vmem>>, vector<8x8xf32>
    tpu.vector_store %arg6[%c0_12, %c0_13], %17 {strides = array<i32>} : memref<8x8xf32, #tpu.memory_space<vmem>>, vector<8x8xf32>,
    %cst_14 = arith.constant 0.000000e+00 : f32
    %19 = vector.broadcast %cst_14 : f32 to vector<8x8xf32>
    %20 = arith.subf %19, %0 : vector<8x8xf32>
    %cst_15 = arith.constant 0.000000e+00 : f32
    %21 = vector.broadcast %cst_15 : f32 to vector<8x8xf32>
    %22 = arith.maximumf %20, %21 : vector<8x8xf32>
    %23 = math.absf %20 : vector<8x8xf32>
    %cst_16 = arith.constant 0.000000e+00 : f32
    %24 = vector.broadcast %cst_16 : f32 to vector<8x8xf32>
    %25 = arith.subf %24, %23 : vector<8x8xf32>
    %26 = math.exp %25 : vector<8x8xf32>
    %27 = math.log1p %26 : vector<8x8xf32>
    %28 = arith.addf %22, %27 : vector<8x8xf32>
    %cst_17 = arith.constant 0.000000e+00 : f32
    %29 = vector.broadcast %cst_17 : f32 to vector<8x8xf32>
    %30 = arith.subf %29, %28 : vector<8x8xf32>
    %cst_18 = arith.constant 0.000000e+00 : f32
    %31 = vector.broadcast %cst_18 : f32 to vector<8x8xf32>
    %32 = arith.maximumf %0, %31 : vector<8x8xf32>
    %33 = math.absf %0 : vector<8x8xf32>
    %cst_19 = arith.constant 0.000000e+00 : f32
    %34 = vector.broadcast %cst_19 : f32 to vector<8x8xf32>
    %35 = arith.subf %34, %33 : vector<8x8xf32>
    %36 = math.exp %35 : vector<8x8xf32>
    %37 = math.log1p %36 : vector<8x8xf32>
    %38 = arith.addf %32, %37 : vector<8x8xf32>
    %cst_20 = arith.constant 0.000000e+00 : f32
    %39 = vector.broadcast %cst_20 : f32 to vector<8x8xf32>
    %40 = arith.subf %39, %38 : vector<8x8xf32>
    %41 = arith.subf %30, %4 : vector<8x8xf32>
    %42 = arith.mulf %17, %41 : vector<8x8xf32>
    %cst_21 = arith.constant 1.000000e+00 : f32
    %43 = vector.broadcast %cst_21 : f32 to vector<8x8xf32>
    %44 = arith.subf %43, %17 : vector<8x8xf32>
    %45 = arith.subf %40, %5 : vector<8x8xf32>
    %46 = arith.mulf %44, %45 : vector<8x8xf32>
    %47 = arith.addf %42, %46 : vector<8x8xf32>
    %cst_22 = arith.constant 0.000000e+00 : f32
    %48 = vector.broadcast %cst_22 : f32 to vector<8x8xf32>
    %49 = arith.select %3, %47, %48 : vector<8x8xi1>, vector<8x8xf32>
    %50 = vector.shape_cast %49 : vector<8x8xf32> to vector<1x8x8xf32>
    %cst_23 = arith.constant dense<0.000000e+00> : vector<1xf32>
    %51 = vector.multi_reduction <add>, %50, %cst_23 [1, 2] : vector<1x8x8xf32> to vector<1xf32>
    %52 = vector.shape_cast %51 : vector<1xf32> to vector<1x1x1xf32>
    %53 = vector.extract %52[0, 0, 0] : f32 from vector<1x1x1xf32>
    %c0_24 = arith.constant 0 : index
    %c0_25 = arith.constant 0 : index
    %54 = vector.load %arg4[%c0_24, %c0_25] : memref<8x8xf32, #tpu.memory_space<vmem>>, vector<8x8xf32>
    %55 = arith.mulf %17, %54 : vector<8x8xf32>
    %c0_26 = arith.constant 0 : index
    %c0_27 = arith.constant 0 : index
    %56 = vector.load %arg5[%c0_26, %c0_27] : memref<8x512xf32, #tpu.memory_space<vmem>>, vector<8x512xf32>
    %cst_28 = arith.constant dense<0.000000e+00> : vector<8x512xf32>
    %57 = tpu.matmul %55, %56, %cst_28 {dimension_numbers = #tpu.dot_dimension_numbers<[0], [0], [1], [1], [0, 1, 1, 1], [], []>} : vector<8x8xf32>, vector<8x512xf32>, vector<8x512xf32> -> vector<8x512xf32>
    %c0_29 = arith.constant 0 : index
    %c0_30 = arith.constant 0 : index
    %58 = vector.load %arg7[%c0_29, %c0_30] : memref<8x512xf32, #tpu.memory_space<vmem>>, vector<8x512xf32>
    tpu.vector_store %arg7[%c0_29, %c0_30], %57 {strides = array<i32>} : memref<8x512xf32, #tpu.memory_space<vmem>>, vector<8x512xf32>,
    %59 = arith.subf %57, %56 : vector<8x512xf32>
    %60 = arith.mulf %59, %59 : vector<8x512xf32>
    %61 = vector.shape_cast %60 : vector<8x512xf32> to vector<1x8x512xf32>
    %cst_31 = arith.constant dense<0.000000e+00> : vector<1xf32>
    %62 = vector.multi_reduction <add>, %61, %cst_31 [1, 2] : vector<1x8x512xf32> to vector<1xf32>
    %63 = vector.shape_cast %62 : vector<1xf32> to vector<1x1x1xf32>
    %64 = vector.extract %63[0, 0, 0] : f32 from vector<1x1x1xf32>
    %cst_32 = arith.constant 4.096000e+03 : f32
    %65 = arith.divf %64, %cst_32 : f32
    %c0_33 = arith.constant 0 : index
    %c0_34 = arith.constant 0 : index
    %66 = memref.load %arg8[%c0_33, %c0_34] : memref<1x2xf32, #tpu.memory_space<smem>>
    memref.store %53, %arg8[%c0_33, %c0_34] : memref<1x2xf32, #tpu.memory_space<smem>>
    %c0_35 = arith.constant 0 : index
    %c1 = arith.constant 1 : index
    %67 = memref.load %arg8[%c0_35, %c1] : memref<1x2xf32, #tpu.memory_space<smem>>
    memref.store %65, %arg8[%c0_35, %c1] : memref<1x2xf32, #tpu.memory_space<smem>>
    return
  }
}

</mosaic_0001>

<llo_original>
// kernel: causal_structure_forward.1
$region0: #{causal_structure_forward.1}
  #allocation0 [shape = 'u32[]', space=smem, size = 0x4, offset = 0x4, fixed_abs, tag = 'smem constant byte address 0x4 - core index']
  #allocation1 [shape = 'u32[144,128]{1,0:T(1,128)}', space=vmem, size = 0x12000, scoped, tag = 'internal scratch']
  %s0 = inlined_call_operand.vmem [shape: f32[8,8], index: 0, kind: input, shape index: {}]
  %s1 = inlined_call_operand.hbm [shape: f32[8,8], index: 1, kind: input, shape index: {}]
  %s2 = inlined_call_operand.vmem [shape: f32[8,8], index: 2, kind: input, shape index: {}]
  %s3 = inlined_call_operand.vmem [shape: f32[8,8], index: 3, kind: input, shape index: {}]
  %s4 = inlined_call_operand.hbm [shape: f32[8,8], index: 4, kind: input, shape index: {}]
  %s5 = inlined_call_operand.vmem [shape: f32[8,512], index: 5, kind: input, shape index: {}]
  %s6 = inlined_call_operand.vmem [shape: f32[8,8], index: 6, kind: output, shape index: {0}]
  %s7 = inlined_call_operand.hbm [shape: f32[8,512], index: 7, kind: output, shape index: {1}]
  %s8 = inlined_call_operand.vmem [shape: f32[1,2], index: 8, kind: output, shape index: {2}]
  %9 = xla_tuple %s6, %s7, %s8
  %s10 = sld [smem:[#allocation0]]
  $region58: #{causal_structure_forward.1} parent=0
    _
  %s12 = ssub.s32 1, %s10
  %s13 = scalar_select 0, %s12, %s10
  $region1: #{causal_structure_forward.1} parent=0
    #allocation2 [shape = 'u8[4096]{0}', space=vmem, size = 0x1000, scoped, tag = 'input window, operand 1, single buffered']
    #allocation3 [shape = 's32[1]{0}', space=sflag, size = 0x4, scoped, tag = 'scoped memory for causal_structure_forward.1']
    #allocation4 [shape = 's32[1]{0}', space=sflag, size = 0x4, scoped, tag = 'scoped memory for causal_structure_forward.1']
    #allocation5 [shape = 's32[1]{0}', space=sflag, size = 0x4, scoped, tag = 'scoped memory for causal_structure_forward.1']
    #allocation6 [shape = 'u8[4096]{0}', space=vmem, size = 0x1000, scoped, tag = 'input window, operand 4, single buffered']
    #allocation7 [shape = 's32[1]{0}', space=sflag, size = 0x4, scoped, tag = 'scoped memory for causal_structure_forward.1']
    #allocation8 [shape = 'u8[16384]{0}', space=vmem, size = 0x4000, scoped, tag = 'output window, operand 1, single buffered']
    #allocation9 [shape = 'u8[512]{0}', space=smem, size = 0x200, scoped, tag = 'output window, operand 2, single buffered']
    %14 = vsyncpa [#allocation3], 0
    %15 = vsyncpa [#allocation7], 0
    %16 = vsyncpa [#allocation4], 0
    %17 = vsyncpa [#allocation5], 0
    // Predicated region
    $region2: #{causal_structure_forward.1} parent=1 // pred_check
      _
    $region3: #{causal_structure_forward.1} parent=1 // pred_check_branch
      %19 = sbr.rel (0) target = $region5
    $region4: #{causal_structure_forward.1} parent=1 // pred_region
      _
    $region5: #{causal_structure_forward.1} parent=1 // pred_fallthru
      _
    // Predicated region
    $region6: #{causal_structure_forward.1} parent=1 // pred_check
      _
    $region7: #{causal_structure_forward.1} parent=1 // pred_check_branch
      %21 = sbr.rel (0) target = $region9
    $region8: #{causal_structure_forward.1} parent=1 // pred_region
      %s23 = ssub.s32 128, 128
      %24 = vsyncadd [#allocation3], %s23
      %s26 = sshll.u32 [#allocation2], 4
      %s27 = int_to_ptr.vmem [resolvable:$true] %s26
      %29 = dma.hbm_to_vmem [thread:$0]  %s1, 128, %s27, [#allocation3]
    $region9: #{causal_structure_forward.1} parent=1 // pred_fallthru
      _
    // Predicated region
    $region10: #{causal_structure_forward.1} parent=1 // pred_check
      _
    $region11: #{causal_structure_forward.1} parent=1 // pred_check_branch
      %31 = sbr.rel (0) target = $region13
    $region12: #{causal_structure_forward.1} parent=1 // pred_region
      _
    $region13: #{causal_structure_forward.1} parent=1 // pred_fallthru
      _
    // Predicated region
    $region14: #{causal_structure_forward.1} parent=1 // pred_check
      _
    $region15: #{causal_structure_forward.1} parent=1 // pred_check_branch
      %33 = sbr.rel (0) target = $region17
    $region16: #{causal_structure_forward.1} parent=1 // pred_region
      _
    $region17: #{causal_structure_forward.1} parent=1 // pred_fallthru
      _
    // Predicated region
    $region18: #{causal_structure_forward.1} parent=1 // pred_check
      _
    $region19: #{causal_structure_forward.1} parent=1 // pred_check_branch
      %35 = sbr.rel (0) target = $region21
    $region20: #{causal_structure_forward.1} parent=1 // pred_region
      %s37 = ssub.s32 128, 128
      %38 = vsyncadd [#allocation7], %s37
      %s40 = sshll.u32 [#allocation6], 4
      %s41 = int_to_ptr.vmem [resolvable:$true] %s40
      %43 = dma.hbm_to_vmem [thread:$0]  %s4, 128, %s41, [#allocation7]
    $region21: #{causal_structure_forward.1} parent=1 // pred_fallthru
      _
    // Predicated region
    $region22: #{causal_structure_forward.1} parent=1 // pred_check
      _
    $region23: #{causal_structure_forward.1} parent=1 // pred_check_branch
      %45 = sbr.rel (0) target = $region25
    $region24: #{causal_structure_forward.1} parent=1 // pred_region
      _
    $region25: #{causal_structure_forward.1} parent=1 // pred_fallthru
      _
    // Predicated region
    $region26: #{causal_structure_forward.1} parent=1 // pred_check
      _
    $region27: #{causal_structure_forward.1} parent=1 // pred_check_branch
      %47 = sbr.rel (0) target = $region29
    $region28: #{causal_structure_forward.1} parent=1 // pred_region
      %48 = dma.done [#allocation3], 128
    $region29: #{causal_structure_forward.1} parent=1 // pred_fallthru
      _
    // Predicated region
    $region30: #{causal_structure_forward.1} parent=1 // pred_check
      _
    $region31: #{causal_structure_forward.1} parent=1 // pred_check_branch
      %50 = sbr.rel (0) target = $region33
    $region32: #{causal_structure_forward.1} parent=1 // pred_region
      %51 = dma.done [#allocation7], 128
    $region33: #{causal_structure_forward.1} parent=1 // pred_fallthru
      _
    %v52 = vld [vmem:[%s0] sm:$0xff]
    %v53 = vld [vmem:[#allocation2] sm:$0xff]
    %vm54 = vcmp.gt.f32.partialorder %v53, 0.5
    %v55 = vld [vmem:[%s2] sm:$0xff]
    %v56 = vld [vmem:[%s3] sm:$0xff]
    %v57 = vxor.u32 %v52, 2147483648
    %v58 = vmul.f32 %v57, 1.442695
    %v59 = vpow.pop %v58
    %v60 = vadd.f32 %v59, 1.0
    %v61 = vrcp.pop %v60
    %v62 = vmul.f32 1.0, %v61
    %v63 = vsel %vm54, %v62, 0.0
    %v64 = vmax.f32 %v63, 1.1920929e-07
    %v65 = vmin.f32 %v64, 0.9999999
    %vm66 = vcmask 64512
    %67 = vst.msk [vmem:[%s6] sm:$0xff] %vm66, %v65
    %v68 = vsub.f32 0.0, %v52
    %v69 = vmax.f32 %v68, 0.0
    %v70 = vand.u32 2147483647, %v68
    %v71 = vsub.f32 0.0, %v70
    %v72 = vmul.f32 %v71, 1.442695
    %v73 = vpow.pop %v72
    %v74 = vadd.f32 %v73, 1.0
    %v75 = vlog2.pop %v74
    %v76 = vmul.f32 %v75, 0.6931472
    %v77 = vmul.f32 -0.5, %v73
    %v78 = vadd.f32 %v77, 1.0
    %v79 = vmul.f32 %v78, %v73
    %v80 = vand.u32 2147483647, %v73
    %vm81 = vcmp.lt.f32.partialorder %v80, 0.0004427343
    %v82 = vsel %vm81, %v79, %v76
    %v83 = vadd.f32 %v69, %v82
    %v84 = vsub.f32 0.0, %v83
    %v85 = vmax.f32 %v52, 0.0
    %v86 = vand.u32 2147483647, %v52
    %v87 = vsub.f32 0.0, %v86
    %v88 = vmul.f32 %v87, 1.442695
    %v89 = vpow.pop %v88
    %v90 = vadd.f32 %v89, 1.0
    %v91 = vlog2.pop %v90
    %v92 = vmul.f32 %v91, 0.6931472
    %v93 = vmul.f32 -0.5, %v89
    %v94 = vadd.f32 %v93, 1.0
    %v95 = vmul.f32 %v94, %v89
    %v96 = vand.u32 2147483647, %v89
    %vm97 = vcmp.lt.f32.partialorder %v96, 0.0004427343
    %v98 = vsel %vm97, %v95, %v92
    %v99 = vadd.f32 %v85, %v98
    %v100 = vsub.f32 0.0, %v99
    %v101 = vsub.f32 %v84, %v55
    %v102 = vmul.f32 %v65, %v101
    %v103 = vsub.f32 1.0, %v65
    %v104 = vsub.f32 %v100, %v56
    %v105 = vmul.f32 %v103, %v104
    %v106 = vadd.f32 %v102, %v105
    %v107 = vsel %vm54, %v106, 0.0
    %v108 = vsel %vm66, %v107, 0.0
    %109 = vadd.xlane.f32.xlu0 %v108
    %v110 = vpop.xlane.xlu0 %109
    %v111 = vrot.slane %v110, 4
    %v112 = vadd.f32 %v110, %v111
    %v113 = vrot.slane %v112, 2
    %v114 = vadd.f32 %v112, %v113
    %v115 = vrot.slane %v114, 1
    %v116 = vadd.f32 %v114, %v115
    %s117 = vtos %v116
    %v118 = vld [vmem:[#allocation6] sm:$0xff]
    %v119 = vmul.f32 %v65, %v118
    %v120 = vld [vmem:[%s5] sm:$0xff]
    %v121 = vld [vmem:[%s5 + $0x8] sm:$0xff]
    %v122 = vld [vmem:[%s5 + $0x10] sm:$0xff]
    %v123 = vld [vmem:[%s5 + $0x18] sm:$0xff]
    %124 = vxpose.xlu0.b32.start [1/16] %v119, 128
    %125 = vxpose.xlu0.b32.cont [2/16] 0.0, 128
    %126 = vxpose.xlu0.b32.cont [3/16] 0.0, 128
    %127 = vxpose.xlu0.b32.cont [4/16] 0.0, 128
    %128 = vxpose.xlu0.b32.cont [5/16] 0.0, 128
    %129 = vxpose.xlu0.b32.cont [6/16] 0.0, 128
    %130 = vxpose.xlu0.b32.cont [7/16] 0.0, 128
    %131 = vxpose.xlu0.b32.cont [8/16] 0.0, 128
    %132 = vxpose.xlu0.b32.cont [9/16] 0.0, 128
    %133 = vxpose.xlu0.b32.cont [10/16] 0.0, 128
    %134 = vxpose.xlu0.b32.cont [11/16] 0.0, 128
    %135 = vxpose.xlu0.b32.cont [12/16] 0.0, 128
    %136 = vxpose.xlu0.b32.cont [13/16] 0.0, 128
    %137 = vxpose.xlu0.b32.cont [14/16] 0.0, 128
    %138 = vxpose.xlu0.b32.cont [15/16] 0.0, 128
    %139 = vxpose.xlu0.b32.end [16/16] 0.0, 128
    %v140 = vpop.trf.xlu0
    %v141 = vpop.trf.xlu0
    %v142 = vpop.trf.xlu0
    %v143 = vpop.trf.xlu0
    %v144 = vpop.trf.xlu0
    %v145 = vpop.trf.xlu0
    %v146 = vpop.trf.xlu0
    %v147 = vpop.trf.xlu0
    %v148 = vpop.trf.xlu0
    %v149 = vpop.trf.xlu0
    %v150 = vpop.trf.xlu0
    %v151 = vpop.trf.xlu0
    %v152 = vpop.trf.xlu0
    %v153 = vpop.trf.xlu0
    %v154 = vpop.trf.xlu0
    %v155 = vpop.trf.xlu0
    %v157 = vsel %vm66, %v140, 0
    %159 = vmatprep.subr.mxu0 %v121
    %160 = vmatpush1.msra.mxu0 %v120
    %161 = vmatprep.subr.mxu0 0.0
    %162 = vmatpush1.msra.mxu0 0.0
    %163 = vmatprep.subr.mxu0 0.0
    %164 = vmatpush1.msra.mxu0 0.0
    %165 = vmatprep.subr.mxu0 0.0
    %166 = vmatpush1.msra.mxu0 0.0
    %167 = vmatprep.subr.mxu0 0.0
    %168 = vmatpush1.msra.mxu0 0.0
    %169 = vmatprep.subr.mxu0 0.0
    %170 = vmatpush1.msra.mxu0 0.0
    %171 = vmatprep.subr.mxu0 0.0
    %172 = vmatpush1.msra.mxu0 0.0
    %173 = vmatprep.subr.mxu0 0.0
    %174 = vmatpush1.msra.mxu0 0.0
    %175 = vmatprep.subr.mxu0 0.0
    %176 = vmatpush1.msra.mxu0 0.0
    %177 = vmatprep.subr.mxu0 0.0
    %178 = vmatpush1.msra.mxu0 0.0
    %179 = vmatprep.subr.mxu0 0.0
    %180 = vmatpush1.msra.mxu0 0.0
    %181 = vmatprep.subr.mxu0 0.0
    %182 = vmatpush1.msra.mxu0 0.0
    %183 = vmatprep.subr.mxu0 0.0
    %184 = vmatpush1.msra.mxu0 0.0
    %185 = vmatprep.subr.mxu0 0.0
    %186 = vmatpush1.msra.mxu0 0.0
    %187 = vmatprep.subr.mxu0 0.0
    %188 = vmatpush1.msra.mxu0 0.0
    %189 = vmatprep.subr.mxu0 0.0
    %190 = vmatpush1.msra.mxu0 0.0
    %191 = vmatprep.subr.mxu0 0.0
    %192 = vmatpush1.msra.mxu0 0.0
    %193 = vmatprep.subr.mxu0 0.0
    %194 = vmatpush1.msra.mxu0 0.0
    %195 = vmatprep.subr.mxu0 0.0
    %196 = vmatpush1.msra.mxu0 0.0
    %197 = vmatprep.subr.mxu0 0.0
    %198 = vmatpush1.msra.mxu0 0.0
    %199 = vmatprep.subr.mxu0 0.0
    %200 = vmatpush1.msra.mxu0 0.0
    %201 = vmatprep.subr.mxu0 0.0
    %202 = vmatpush1.msra.mxu0 0.0
    %203 = vmatprep.subr.mxu0 0.0
    %204 = vmatpush1.msra.mxu0 0.0
    %205 = vmatprep.subr.mxu0 0.0
    %206 = vmatpush1.msra.mxu0 0.0
    %207 = vmatprep.subr.mxu0 0.0
    %208 = vmatpush1.msra.mxu0 0.0
    %209 = vmatprep.subr.mxu0 0.0
    %210 = vmatpush1.msra.mxu0 0.0
    %211 = vmatprep.subr.mxu0 0.0
    %212 = vmatpush1.msra.mxu0 0.0
    %213 = vmatprep.subr.mxu0 0.0
    %214 = vmatpush1.msra.mxu0 0.0
    %215 = vmatprep.subr.mxu0 0.0
    %216 = vmatpush1.msra.mxu0 0.0
    %217 = vmatprep.subr.mxu0 0.0
    %218 = vmatpush1.msra.mxu0 0.0
    %219 = vmatprep.subr.mxu0 0.0
    %220 = vmatpush1.msra.mxu0 0.0
    %221 = vmatprep.subr.mxu0 0.0
    %222 = vmatpush1.msra.mxu0 0.0
    %223 = vmatprep.mubr.f32.mxu0 0.0
    %224 = vmatmul.mubr.f32.gmra.mrb[0].mxu0 %v157
    %v225 = vpop.f32.mrb[0].mxu0
    %v226 = vadd.f32 0.0, %v225
    %v227 = vpop.f32.mrb[0].mxu0
    %v228 = vadd.f32 0.0, %v227
    %229 = vdwg.mxu0
    %230 = vmatprep.subr.mxu0 %v123
    %231 = vmatpush1.msra.mxu0 %v122
    %232 = vmatprep.subr.mxu0 0.0
    %233 = vmatpush1.msra.mxu0 0.0
    %234 = vmatprep.subr.mxu0 0.0
    %235 = vmatpush1.msra.mxu0 0.0
    %236 = vmatprep.subr.mxu0 0.0
    %237 = vmatpush1.msra.mxu0 0.0
    %238 = vmatprep.subr.mxu0 0.0
    %239 = vmatpush1.msra.mxu0 0.0
    %240 = vmatprep.subr.mxu0 0.0
    %241 = vmatpush1.msra.mxu0 0.0
    %242 = vmatprep.subr.mxu0 0.0
    %243 = vmatpush1.msra.mxu0 0.0
    %244 = vmatprep.subr.mxu0 0.0
    %245 = vmatpush1.msra.mxu0 0.0
    %246 = vmatprep.subr.mxu0 0.0
    %247 = vmatpush1.msra.mxu0 0.0
    %248 = vmatprep.subr.mxu0 0.0
    %249 = vmatpush1.msra.mxu0 0.0
    %250 = vmatprep.subr.mxu0 0.0
    %251 = vmatpush1.msra.mxu0 0.0
    %252 = vmatprep.subr.mxu0 0.0
    %253 = vmatpush1.msra.mxu0 0.0
    %254 = vmatprep.subr.mxu0 0.0
    %255 = vmatpush1.msra.mxu0 0.0
    %256 = vmatprep.subr.mxu0 0.0
    %257 = vmatpush1.msra.mxu0 0.0
    %258 = vmatprep.subr.mxu0 0.0
    %259 = vmatpush1.msra.mxu0 0.0
    %260 = vmatprep.subr.mxu0 0.0
    %261 = vmatpush1.msra.mxu0 0.0
    %262 = vmatprep.subr.mxu0 0.0
    %263 = vmatpush1.msra.mxu0 0.0
    %264 = vmatprep.subr.mxu0 0.0
    %265 = vmatpush1.msra.mxu0 0.0
    %266 = vmatprep.subr.mxu0 0.0
    %267 = vmatpush1.msra.mxu0 0.0
    %268 = vmatprep.subr.mxu0 0.0
    %269 = vmatpush1.msra.mxu0 0.0
    %270 = vmatprep.subr.mxu0 0.0
    %271 = vmatpush1.msra.mxu0 0.0
    %272 = vmatprep.subr.mxu0 0.0
    %273 = vmatpush1.msra.mxu0 0.0
    %274 = vmatprep.subr.mxu0 0.0
    %275 = vmatpush1.msra.mxu0 0.0
    %276 = vmatprep.subr.mxu0 0.0
    %277 = vmatpush1.msra.mxu0 0.0
    %278 = vmatprep.subr.mxu0 0.0
    %279 = vmatpush1.msra.mxu0 0.0
    %280 = vmatprep.subr.mxu0 0.0
    %281 = vmatpush1.msra.mxu0 0.0
    %282 = vmatprep.subr.mxu0 0.0
    %283 = vmatpush1.msra.mxu0 0.0
    %284 = vmatprep.subr.mxu0 0.0
    %285 = vmatpush1.msra.mxu0 0.0
    %286 = vmatprep.subr.mxu0 0.0
    %287 = vmatpush1.msra.mxu0 0.0
    %288 = vmatprep.subr.mxu0 0.0
    %289 = vmatpush1.msra.mxu0 0.0
    %290 = vmatprep.subr.mxu0 0.0
    %291 = vmatpush1.msra.mxu0 0.0
    %292 = vmatprep.subr.mxu0 0.0
    %293 = vmatpush1.msra.mxu0 0.0
    %294 = vmatprep.mubr.f32.mxu0 0.0
    %295 = vmatmul.mubr.f32.gmra.mrb[0].mxu0 %v157
    %v296 = vpop.f32.mrb[0].mxu0
    %v297 = vadd.f32 0.0, %v296
    %v298 = vpop.f32.mrb[0].mxu0
    %v299 = vadd.f32 0.0, %v298
    %300 = vdwg.mxu0
    %301 = vst [vmem:[#allocation8] sm:$0xff] %v226
    %302 = vst [vmem:[#allocation8 + $0x8] sm:$0xff] %v228
    %303 = vst [vmem:[#allocation8 + $0x10] sm:$0xff] %v297
    %304 = vst [vmem:[#allocation8 + $0x18] sm:$0xff] %v299
    %v305 = vsub.f32 %v226, %v120
    %v306 = vsub.f32 %v228, %v121
    %v307 = vsub.f32 %v297, %v122
    %v308 = vsub.f32 %v299, %v123
    %v309 = vmul.f32 %v305, %v305
    %v310 = vmul.f32 %v306, %v306
    %v311 = vmul.f32 %v307, %v307
    %v312 = vmul.f32 %v308, %v308
    %v313 = vadd.f32 %v309, %v310
    %v314 = vadd.f32 %v313, %v311
    %v315 = vadd.f32 %v314, %v312
    %316 = vadd.xlane.f32.xlu0 %v315
    %v317 = vpop.xlane.xlu0 %316
    %v318 = vrot.slane %v317, 4
    %v319 = vadd.f32 %v317, %v318
    %v320 = vrot.slane %v319, 2
    %v321 = vadd.f32 %v319, %v320
    %v322 = vrot.slane %v321, 1
    %v323 = vadd.f32 %v321, %v322
    %s324 = vtos %v323
    %v325 = vrcp.pop 4096.0
    %s326 = vtos %v325
    %s327 = smul.f32 %s324, %s326
    %s328 = scalar_lea.smem [#allocation9], 0
    %329 = sst [smem:[%s328]] %s117
    %s330 = scalar_lea.smem [#allocation9], 1
    %331 = sst [smem:[%s330]] %s327
    // Predicated region
    $region34: #{causal_structure_forward.1} parent=1 // pred_check
      _
    $region35: #{causal_structure_forward.1} parent=1 // pred_check_branch
      %333 = sbr.rel (0) target = $region37
    $region36: #{causal_structure_forward.1} parent=1 // pred_region
      _
    $region37: #{causal_structure_forward.1} parent=1 // pred_fallthru
      _
    // Predicated region
    $region38: #{causal_structure_forward.1} parent=1 // pred_check
      _
    $region39: #{causal_structure_forward.1} parent=1 // pred_check_branch
      %335 = sbr.rel (0) target = $region41
    $region40: #{causal_structure_forward.1} parent=1 // pred_region
      %s337 = ssub.s32 512, 512
      %338 = vsyncadd [#allocation4], %s337
      %s340 = sshll.u32 [#allocation8], 4
      %s341 = int_to_ptr.vmem [resolvable:$true] %s340
      %343 = dma.vmem_to_hbm [thread:$0]  %s341, 512, %s7, [#allocation4]
    $region41: #{causal_structure_forward.1} parent=1 // pred_fallthru
      _
    // Predicated region
    $region42: #{causal_structure_forward.1} parent=1 // pred_check
      _
    $region43: #{causal_structure_forward.1} parent=1 // pred_check_branch
      %345 = sbr.rel (0) target = $region45
    $region44: #{causal_structure_forward.1} parent=1 // pred_region
      %s347 = ssub.s32 16, 16
      %348 = vsyncadd [#allocation5], %s347
      %s350 = sshll.u32 %s8, 4
      %s351 = int_to_ptr.vmem [resolvable:$true] %s350
      %353 = dma.smem_to_vmem [#allocation9], 16, %s351, [#allocation5]
    $region45: #{causal_structure_forward.1} parent=1 // pred_fallthru
      _
    // Predicated region
    $region46: #{causal_structure_forward.1} parent=1 // pred_check
      _
    $region47: #{causal_structure_forward.1} parent=1 // pred_check_branch
      %355 = sbr.rel (0) target = $region49
    $region48: #{causal_structure_forward.1} parent=1 // pred_region
      _
    $region49: #{causal_structure_forward.1} parent=1 // pred_fallthru
      _
    // Predicated region
    $region50: #{causal_structure_forward.1} parent=1 // pred_check
      _
    $region51: #{causal_structure_forward.1} parent=1 // pred_check_branch
      %357 = sbr.rel (0) target = $region53
    $region52: #{causal_structure_forward.1} parent=1 // pred_region
      %358 = dma.done [#allocation4], 512
    $region53: #{causal_structure_forward.1} parent=1 // pred_fallthru
      _
    // Predicated region
    $region54: #{causal_structure_forward.1} parent=1 // pred_check
      _
    $region55: #{causal_structure_forward.1} parent=1 // pred_check_branch
      %360 = sbr.rel (0) target = $region57
    $region56: #{causal_structure_forward.1} parent=1 // pred_region
      %361 = dma.done [#allocation5], 16
    $region57: #{causal_structure_forward.1} parent=1 // pred_fallthru
      _
    %362 = sfence
    %363 = vsyncpa [#allocation3], 1
    %364 = vsyncpa [#allocation7], 1
    %365 = vsyncpa [#allocation4], 1
    %366 = vsyncpa [#allocation5], 1

</llo_original>
